<compile_context>
chip_gen: v7x
topology: tpu7x:2x2x1
jax: 0.10.0
libtpu: 0.0.40
codegen_flags: <defaults>
</compile_context>

<pallas_src>
import functools

import jax
import jax.numpy as jnp
from jax import lax
from jax.experimental import pallas as pl
from jax.experimental.pallas import tpu as pltpu


def _round_up(x, m):
    return ((x + m - 1) // m) * m


def _option_critic_kernel(x_ref, w_ref, b_ref, opt_ref, o_ref, *,
                          n_options, outdim, dpad):
    # x_ref:   (TB, H)          batch tile of inputs
    # w_ref:   (H, O*Dp)        full weight slab (per-option columns padded to 128)
    # b_ref:   (1, O*Dp)        full bias row
    # opt_ref: (TB, 1) int32    per-row option index
    # o_ref:   (TB, Dp)         lane-dense output tile (Dp = round_up(D, 128))
    x = x_ref[...]
    w = w_ref[...]
    b = b_ref[...]

    # One wide MXU pass: logits for every option at once.  (TB, O*Dp)
    logits_all = jnp.dot(x, w, preferred_element_type=jnp.float32) + b

    # Per-row option selection via where() over vreg-aligned static slices.
    # Out-of-range option values fall back to option 0 (reference would gather).
    opt = opt_ref[...]                                   # (TB, 1) int32
    logits = logits_all[:, 0:dpad]                       # (TB, Dp)
    for o in range(1, n_options):
        logits = jnp.where(opt == o,
                           logits_all[:, o * dpad:(o + 1) * dpad],
                           logits)

    # Mask the padded lanes so the softmax only spans the real D outputs.
    if dpad > outdim:
        lane = lax.broadcasted_iota(jnp.int32, logits.shape, 1)
        logits = jnp.where(lane < outdim, logits, jnp.float32(-1e30))

    # softmax epilogue (out_activation), f32 math.  Approx reciprocal on the
    # EUP + one Newton-Raphson step to keep the 1e-5 tolerance.
    m = jnp.max(logits, axis=-1, keepdims=True)
    e = jnp.exp(logits - m)
    denom = jnp.sum(e, axis=-1, keepdims=True)
    r = pl.reciprocal(denom, approx=True)
    r = r * (2.0 - denom * r)                            # NR refinement
    o_ref[...] = (e * r).astype(o_ref.dtype)


@jax.jit
def option_critic_head(x, option, weight, bias):
    """x: (B, H) f32, option: (B,) i32, weight: (O, H, D), bias: (O, D)."""
    B, H = x.shape
    O, _, D = weight.shape

    # Pad each option's D columns to the 128-lane boundary, then flatten the
    # weights/bias into lane-dense 2-D slabs (column c = o*Dp + d).
    Dp = _round_up(D, 128)
    w_pad = jnp.pad(weight, ((0, 0), (0, 0), (0, Dp - D)))          # (O, H, Dp)
    w_all = jnp.transpose(w_pad, (1, 0, 2)).reshape(H, O * Dp)      # (H, O*Dp)
    b_all = jnp.pad(bias, ((0, 0), (0, Dp - D))).reshape(1, O * Dp) # (1, O*Dp)
    option = option.astype(jnp.int32)

    # Batch tiling: big tiles (up to 512 rows) to amortize per-step overhead,
    # re-balanced so >=2 tiles exist whenever possible (v7x dual-TC sharding).
    B_pad8 = _round_up(B, 8)
    TB = min(512, B_pad8)
    n_tiles = pl.cdiv(B_pad8, TB)
    if B_pad8 > 8:
        n_tiles = max(n_tiles, 2)
    TB = _round_up(pl.cdiv(B_pad8, n_tiles), 8)      # even split, minimal padding
    n_tiles = pl.cdiv(B_pad8, TB)
    B_pad = n_tiles * TB

    if B_pad != B:
        x = jnp.pad(x, ((0, B_pad - B), (0, 0)))
        option = jnp.pad(option, (0, B_pad - B))     # padded rows -> option 0
    opt2 = option.reshape(B_pad, 1)

    # Explicit VMEM budget: BlockSpec inputs are double-buffered, so the
    # resident weight slab costs 2x its size; keep headroom for x/out tiles.
    est = 4 * (2 * TB * H + 2 * H * O * Dp + 2 * O * Dp + 2 * TB * 128 + 2 * TB * Dp)
    vmem_limit = int(min(max(2 * est + (4 << 20), 16 << 20), 64 << 20))

    kernel = functools.partial(_option_critic_kernel,
                               n_options=O, outdim=D, dpad=Dp)

    out = pl.pallas_call(
        kernel,
        out_shape=jax.ShapeDtypeStruct((B_pad, Dp), x.dtype),
        grid_spec=pltpu.PrefetchScalarGridSpec(
            num_scalar_prefetch=0,
            grid=(n_tiles,),
            in_specs=[
                pl.BlockSpec((TB, H), lambda i: (i, 0)),          # x tile
                pl.BlockSpec((H, O * Dp), lambda i: (0, 0)),      # full weight slab
                pl.BlockSpec((1, O * Dp), lambda i: (0, 0)),      # full bias row
                pl.BlockSpec((TB, 1), lambda i: (i, 0)),          # option tile
            ],
            out_specs=pl.BlockSpec((TB, Dp), lambda i: (i, 0)),   # lane-dense out
        ),
        compiler_params=pltpu.CompilerParams(
            dimension_semantics=("parallel",),
            vmem_limit_bytes=vmem_limit,
        ),
    )(x, w_all, b_all, opt2)
    return out[:B, :D]


def _reference(x, option, weight, bias):
    w = weight[option]              # (B, H, D)
    b = bias[option]                # (B, D)
    y = jnp.einsum("bh,bhd->bd", x, w) + b
    return jax.nn.softmax(y, axis=-1)


if __name__ == "__main__":
    # Small config consistent with the module: hdim=32, n_options=4, outdim=16
    B, H, O, D = 8, 32, 4, 16

    key = jax.random.PRNGKey(0)
    kx, kw, kb, ko = jax.random.split(key, 4)

    x = jax.random.normal(kx, (B, H), dtype=jnp.float32)
    option = jax.random.randint(ko, (B,), 0, O, dtype=jnp.int32)
    # Deterministic parameter init (synthetic; no checkpoint load).
    weight = jax.random.normal(kw, (O, H, D), dtype=jnp.float32) * 0.1
    bias = jax.random.normal(kb, (O, D), dtype=jnp.float32) * 0.01

    out = option_critic_head(x, option, weight, bias)
    out = jax.block_until_ready(out)

    ref = _reference(x, option, weight, bias)
    assert out.shape == (B, D)
    assert jnp.allclose(out, ref, atol=1e-5, rtol=1e-5), (
        f"max err {jnp.max(jnp.abs(out - ref))}"
    )
    # Rows of a softmax output sum to 1.
    assert jnp.allclose(jnp.sum(out, axis=-1), jnp.ones((B,)), atol=1e-5)

    print("KERNEL_OK")
</pallas_src>

<mosaic_0001>
module attributes {stable_mosaic.version = 11 : i64} {
  func.func @_option_critic_kernel(%arg0: i32, %arg1: memref<8x32xf32, #tpu.memory_space<vmem>>, %arg2: memref<32x512xf32, #tpu.memory_space<vmem>>, %arg3: memref<1x512xf32, #tpu.memory_space<vmem>>, %arg4: memref<8x1xi32, #tpu.memory_space<vmem>>, %arg5: memref<8x128xf32, #tpu.memory_space<vmem>>) attributes {dimension_semantics = [#tpu.dimension_semantics<parallel>], iteration_bounds = array<i64: 1>, scalar_prefetch = 0 : i64, scratch_operands = 0 : i64, tpu.core_type = #tpu.core_type<tc>, window_params = [{transform_indices = @transform_0, window_bounds = array<i64: 8, 32>}, {pipeline_mode = #tpu.pipeline_mode<synchronous>, transform_indices = @transform_1, window_bounds = array<i64: 32, 512>}, {pipeline_mode = #tpu.pipeline_mode<synchronous>, transform_indices = @transform_2, window_bounds = array<i64: 1, 512>}, {transform_indices = @transform_3, window_bounds = array<i64: 8, 1>}, {transform_indices = @transform_4, window_bounds = array<i64: 8, 128>}]} {
    %c0 = arith.constant 0 : index
    %c0_0 = arith.constant 0 : index
    %0 = vector.load %arg1[%c0, %c0_0] : memref<8x32xf32, #tpu.memory_space<vmem>>, vector<8x32xf32>
    %c0_1 = arith.constant 0 : index
    %c0_2 = arith.constant 0 : index
    %1 = vector.load %arg2[%c0_1, %c0_2] : memref<32x512xf32, #tpu.memory_space<vmem>>, vector<32x512xf32>
    %c0_3 = arith.constant 0 : index
    %c0_4 = arith.constant 0 : index
    %2 = vector.load %arg3[%c0_3, %c0_4] : memref<1x512xf32, #tpu.memory_space<vmem>>, vector<1x512xf32>
    %cst = arith.constant dense<0.000000e+00> : vector<8x512xf32>
    %3 = tpu.matmul %0, %1, %cst {dimension_numbers = #tpu.dot_dimension_numbers<[1], [0], [0], [1], [0, 0, 1, 1], [], []>} : vector<8x32xf32>, vector<32x512xf32>, vector<8x512xf32> -> vector<8x512xf32>
    %4 = vector.broadcast %2 : vector<1x512xf32> to vector<8x512xf32>
    %5 = arith.addf %3, %4 : vector<8x512xf32>
    %c0_5 = arith.constant 0 : index
    %c0_6 = arith.constant 0 : index
    %6 = vector.load %arg4[%c0_5, %c0_6] : memref<8x1xi32, #tpu.memory_space<vmem>>, vector<8x1xi32>
    %7 = vector.extract_strided_slice %5 {offsets = [0, 0], sizes = [8, 128], strides = [1, 1]} : vector<8x512xf32> to vector<8x128xf32>
    %c1_i32 = arith.constant 1 : i32
    %8 = vector.broadcast %c1_i32 : i32 to vector<8x1xi32>
    %9 = arith.cmpi eq, %6, %8 : vector<8x1xi32>
    %10 = vector.extract_strided_slice %5 {offsets = [0, 128], sizes = [8, 128], strides = [1, 1]} : vector<8x512xf32> to vector<8x128xf32>
    %11 = vector.shape_cast %9 : vector<8x1xi1> to vector<8x1xi1>
    %12 = vector.broadcast %11 : vector<8x1xi1> to vector<8x128xi1>
    %13 = arith.select %12, %10, %7 : vector<8x128xi1>, vector<8x128xf32>
    %c2_i32 = arith.constant 2 : i32
    %14 = vector.broadcast %c2_i32 : i32 to vector<8x1xi32>
    %15 = arith.cmpi eq, %6, %14 : vector<8x1xi32>
    %16 = vector.extract_strided_slice %5 {offsets = [0, 256], sizes = [8, 128], strides = [1, 1]} : vector<8x512xf32> to vector<8x128xf32>
    %17 = vector.shape_cast %15 : vector<8x1xi1> to vector<8x1xi1>
    %18 = vector.broadcast %17 : vector<8x1xi1> to vector<8x128xi1>
    %19 = arith.select %18, %16, %13 : vector<8x128xi1>, vector<8x128xf32>
    %c3_i32 = arith.constant 3 : i32
    %20 = vector.broadcast %c3_i32 : i32 to vector<8x1xi32>
    %21 = arith.cmpi eq, %6, %20 : vector<8x1xi32>
    %22 = vector.extract_strided_slice %5 {offsets = [0, 384], sizes = [8, 128], strides = [1, 1]} : vector<8x512xf32> to vector<8x128xf32>
    %23 = vector.shape_cast %21 : vector<8x1xi1> to vector<8x1xi1>
    %24 = vector.broadcast %23 : vector<8x1xi1> to vector<8x128xi1>
    %25 = arith.select %24, %22, %19 : vector<8x128xi1>, vector<8x128xf32>
    %26 = tpu.iota {dimensions = array<i32: 1>} : vector<8x128xi32>
    %c16_i32 = arith.constant 16 : i32
    %27 = vector.broadcast %c16_i32 : i32 to vector<8x128xi32>
    %28 = arith.cmpi slt, %26, %27 : vector<8x128xi32>
    %cst_7 = arith.constant -1.000000e+30 : f32
    %29 = vector.broadcast %cst_7 : f32 to vector<8x128xf32>
    %30 = arith.select %28, %25, %29 : vector<8x128xi1>, vector<8x128xf32>
    %cst_8 = arith.constant dense<0xFF800000> : vector<8xf32>
    %31 = vector.multi_reduction <maximumf>, %30, %cst_8 [1] : vector<8x128xf32> to vector<8xf32>
    %32 = vector.shape_cast %31 : vector<8xf32> to vector<8x1xf32>
    %33 = vector.broadcast %32 : vector<8x1xf32> to vector<8x128xf32>
    %34 = arith.subf %30, %33 : vector<8x128xf32>
    %35 = math.exp %34 : vector<8x128xf32>
    %cst_9 = arith.constant dense<0.000000e+00> : vector<8xf32>
    %36 = vector.multi_reduction <add>, %35, %cst_9 [1] : vector<8x128xf32> to vector<8xf32>
    %37 = vector.shape_cast %36 : vector<8xf32> to vector<8x1xf32>
    %38 = tpu.reciprocal %37 {approx = true} : vector<8x1xf32> -> vector<8x1xf32>
    %39 = arith.mulf %37, %38 : vector<8x1xf32>
    %cst_10 = arith.constant 2.000000e+00 : f32
    %40 = vector.broadcast %cst_10 : f32 to vector<8x1xf32>
    %41 = arith.subf %40, %39 : vector<8x1xf32>
    %42 = arith.mulf %38, %41 : vector<8x1xf32>
    %43 = vector.broadcast %42 : vector<8x1xf32> to vector<8x128xf32>
    %44 = arith.mulf %35, %43 : vector<8x128xf32>
    %c0_11 = arith.constant 0 : index
    %c0_12 = arith.constant 0 : index
    %45 = vector.load %arg5[%c0_11, %c0_12] : memref<8x128xf32, #tpu.memory_space<vmem>>, vector<8x128xf32>
    tpu.vector_store %arg5[%c0_11, %c0_12], %44 {strides = array<i32>} : memref<8x128xf32, #tpu.memory_space<vmem>>, vector<8x128xf32>,
    return
  }
  func.func @transform_0(%arg0: i32) -> (i32, i32) {
    %c0_i32 = arith.constant 0 : i32
    %c0_i32_0 = arith.constant 0 : i32
    return %arg0, %c0_i32 : i32, i32
  }
  func.func @transform_1(%arg0: i32) -> (i32, i32) {
    %c0_i32 = arith.constant 0 : i32
    %c0_i32_0 = arith.constant 0 : i32
    %c0_i32_1 = arith.constant 0 : i32
    return %c0_i32, %c0_i32_0 : i32, i32
  }
  func.func @transform_2(%arg0: i32) -> (i32, i32) {
    %c0_i32 = arith.constant 0 : i32
    %c0_i32_0 = arith.constant 0 : i32
    %c0_i32_1 = arith.constant 0 : i32
    return %c0_i32, %c0_i32_0 : i32, i32
  }
  func.func @transform_3(%arg0: i32) -> (i32, i32) {
    %c0_i32 = arith.constant 0 : i32
    %c0_i32_0 = arith.constant 0 : i32
    return %arg0, %c0_i32 : i32, i32
  }
  func.func @transform_4(%arg0: i32) -> (i32, i32) {
    %c0_i32 = arith.constant 0 : i32
    %c0_i32_0 = arith.constant 0 : i32
    return %arg0, %c0_i32 : i32, i32
  }
}

</mosaic_0001>

<llo_original>
// kernel: option_critic_head.1
$region0: #{option_critic_head.1}
  #allocation0 [shape = 'u32[]', space=smem, size = 0x4, offset = 0x4, fixed_abs, tag = 'smem constant byte address 0x4 - core index']
  #allocation1 [shape = 'u32[144,128]{1,0:T(1,128)}', space=vmem, size = 0x12000, scoped, tag = 'internal scratch']
  %s0 = inlined_call_operand.vmem [shape: f32[8,32], index: 0, kind: input, shape index: {}]
  %s1 = inlined_call_operand.vmem [shape: f32[32,512], index: 1, kind: input, shape index: {}]
  %s2 = inlined_call_operand.vmem [shape: f32[1,512], index: 2, kind: input, shape index: {}]
  %s3 = inlined_call_operand.vmem [shape: s32[8,1], index: 3, kind: input, shape index: {}]
  %s4 = inlined_call_operand.hbm [shape: f32[8,128], index: 4, kind: output, shape index: {}]
  %s5 = sld [smem:[#allocation0]]
  $region26: #{option_critic_head.1} parent=0
    _
  %s7 = ssub.s32 1, %s5
  %s8 = scalar_select 0, %s7, %s5
  $region1: #{option_critic_head.1} parent=0
    #allocation2 [shape = 'u8[4096]{0}', space=vmem, size = 0x1000, scoped, tag = 'output window, operand 0, single buffered']
    #allocation3 [shape = 's32[1]{0}', space=sflag, size = 0x4, scoped, tag = 'scoped memory for option_critic_head.1']
    %9 = vsyncpa [#allocation3], 0
    // Predicated region
    $region2: #{option_critic_head.1} parent=1 // pred_check
      _
    $region3: #{option_critic_head.1} parent=1 // pred_check_branch
      %11 = sbr.rel (0) target = $region5
    $region4: #{option_critic_head.1} parent=1 // pred_region
      _
    $region5: #{option_critic_head.1} parent=1 // pred_fallthru
      _
    // Predicated region
    $region6: #{option_critic_head.1} parent=1 // pred_check
      _
    $region7: #{option_critic_head.1} parent=1 // pred_check_branch
      %13 = sbr.rel (0) target = $region9
    $region8: #{option_critic_head.1} parent=1 // pred_region
      _
    $region9: #{option_critic_head.1} parent=1 // pred_fallthru
      _
    // Predicated region
    $region10: #{option_critic_head.1} parent=1 // pred_check
      _
    $region11: #{option_critic_head.1} parent=1 // pred_check_branch
      %15 = sbr.rel (0) target = $region13
    $region12: #{option_critic_head.1} parent=1 // pred_region
      _
    $region13: #{option_critic_head.1} parent=1 // pred_fallthru
      _
    // Predicated region
    $region14: #{option_critic_head.1} parent=1 // pred_check
      _
    $region15: #{option_critic_head.1} parent=1 // pred_check_branch
      %17 = sbr.rel (0) target = $region17
    $region16: #{option_critic_head.1} parent=1 // pred_region
      _
    $region17: #{option_critic_head.1} parent=1 // pred_fallthru
      _
    %v18 = vld [vmem:[%s0] sm:$0xff]
    %v19 = vld [vmem:[%s1] sm:$0xff]
    %v20 = vld [vmem:[%s1 + $0x8] sm:$0xff]
    %v21 = vld [vmem:[%s1 + $0x10] sm:$0xff]
    %v22 = vld [vmem:[%s1 + $0x18] sm:$0xff]
    %v23 = vld [vmem:[%s1 + $0x20] sm:$0xff]
    %v24 = vld [vmem:[%s1 + $0x28] sm:$0xff]
    %v25 = vld [vmem:[%s1 + $0x30] sm:$0xff]
    %v26 = vld [vmem:[%s1 + $0x38] sm:$0xff]
    %v27 = vld [vmem:[%s1 + $0x40] sm:$0xff]
    %v28 = vld [vmem:[%s1 + $0x48] sm:$0xff]
    %v29 = vld [vmem:[%s1 + $0x50] sm:$0xff]
    %v30 = vld [vmem:[%s1 + $0x58] sm:$0xff]
    %v31 = vld [vmem:[%s1 + $0x60] sm:$0xff]
    %v32 = vld [vmem:[%s1 + $0x68] sm:$0xff]
    %v33 = vld [vmem:[%s1 + $0x70] sm:$0xff]
    %v34 = vld [vmem:[%s1 + $0x78] sm:$0xff]
    %v35 = vld [vmem:[%s2] sm:$0xf]
    %v37 = vlaneseq
    %v38 = vshrl.u32 %v37, 7
    %v39 = vsub.s32 0, %v38
    %v40 = vrot.slane %v35, %v39
    %v41 = vlaneseq
    %v42 = vshrl.u32 %v41, 7
    %v43 = vsub.s32 1, %v42
    %v44 = vrot.slane %v35, %v43
    %v45 = vlaneseq
    %v46 = vshrl.u32 %v45, 7
    %v47 = vsub.s32 2, %v46
    %v48 = vrot.slane %v35, %v47
    %v49 = vlaneseq
    %v50 = vshrl.u32 %v49, 7
    %v51 = vsub.s32 3, %v50
    %v52 = vrot.slane %v35, %v51
    %vm57 = vcmask 261120
    %v59 = vsel %vm57, %v18, 0
    %61 = vmatprep.subr.mxu0 %v20
    %62 = vmatpush1.msra.mxu0 %v19
    %63 = vmatprep.subr.mxu0 %v24
    %64 = vmatpush1.msra.mxu0 %v23
    %65 = vmatprep.subr.mxu0 %v28
    %66 = vmatpush1.msra.mxu0 %v27
    %67 = vmatprep.subr.mxu0 %v32
    %68 = vmatpush1.msra.mxu0 %v31
    %69 = vmatprep.subr.mxu0 0.0
    %70 = vmatpush1.msra.mxu0 0.0
    %71 = vmatprep.subr.mxu0 0.0
    %72 = vmatpush1.msra.mxu0 0.0
    %73 = vmatprep.subr.mxu0 0.0
    %74 = vmatpush1.msra.mxu0 0.0
    %75 = vmatprep.subr.mxu0 0.0
    %76 = vmatpush1.msra.mxu0 0.0
    %77 = vmatprep.subr.mxu0 0.0
    %78 = vmatpush1.msra.mxu0 0.0
    %79 = vmatprep.subr.mxu0 0.0
    %80 = vmatpush1.msra.mxu0 0.0
    %81 = vmatprep.subr.mxu0 0.0
    %82 = vmatpush1.msra.mxu0 0.0
    %83 = vmatprep.subr.mxu0 0.0
    %84 = vmatpush1.msra.mxu0 0.0
    %85 = vmatprep.subr.mxu0 0.0
    %86 = vmatpush1.msra.mxu0 0.0
    %87 = vmatprep.subr.mxu0 0.0
    %88 = vmatpush1.msra.mxu0 0.0
    %89 = vmatprep.subr.mxu0 0.0
    %90 = vmatpush1.msra.mxu0 0.0
    %91 = vmatprep.subr.mxu0 0.0
    %92 = vmatpush1.msra.mxu0 0.0
    %93 = vmatprep.subr.mxu0 0.0
    %94 = vmatpush1.msra.mxu0 0.0
    %95 = vmatprep.subr.mxu0 0.0
    %96 = vmatpush1.msra.mxu0 0.0
    %97 = vmatprep.subr.mxu0 0.0
    %98 = vmatpush1.msra.mxu0 0.0
    %99 = vmatprep.subr.mxu0 0.0
    %100 = vmatpush1.msra.mxu0 0.0
    %101 = vmatprep.subr.mxu0 0.0
    %102 = vmatpush1.msra.mxu0 0.0
    %103 = vmatprep.subr.mxu0 0.0
    %104 = vmatpush1.msra.mxu0 0.0
    %105 = vmatprep.subr.mxu0 0.0
    %106 = vmatpush1.msra.mxu0 0.0
    %107 = vmatprep.subr.mxu0 0.0
    %108 = vmatpush1.msra.mxu0 0.0
    %109 = vmatprep.subr.mxu0 0.0
    %110 = vmatpush1.msra.mxu0 0.0
    %111 = vmatprep.subr.mxu0 0.0
    %112 = vmatpush1.msra.mxu0 0.0
    %113 = vmatprep.subr.mxu0 0.0
    %114 = vmatpush1.msra.mxu0 0.0
    %115 = vmatprep.subr.mxu0 0.0
    %116 = vmatpush1.msra.mxu0 0.0
    %117 = vmatprep.subr.mxu0 0.0
    %118 = vmatpush1.msra.mxu0 0.0
    %119 = vmatprep.subr.mxu0 0.0
    %120 = vmatpush1.msra.mxu0 0.0
    %121 = vmatprep.subr.mxu0 0.0
    %122 = vmatpush1.msra.mxu0 0.0
    %123 = vmatprep.subr.mxu0 0.0
    %124 = vmatpush1.msra.mxu0 0.0
    %125 = vmatprep.mubr.f32.mxu0 0.0
    %126 = vmatmul.mubr.f32.gmra.mrb[0].mxu0 %v59
    %v127 = vpop.f32.mrb[0].mxu0
    %v128 = vadd.f32 %v40, %v127
    %v129 = vpop.f32.mrb[0].mxu0
    %v130 = vadd.f32 %v44, %v129
    %131 = vdwg.mxu0
    %132 = vmatprep.subr.mxu0 %v22
    %133 = vmatpush1.msra.mxu0 %v21
    %134 = vmatprep.subr.mxu0 %v26
    %135 = vmatpush1.msra.mxu0 %v25
    %136 = vmatprep.subr.mxu0 %v30
    %137 = vmatpush1.msra.mxu0 %v29
    %138 = vmatprep.subr.mxu0 %v34
    %139 = vmatpush1.msra.mxu0 %v33
    %140 = vmatprep.subr.mxu0 0.0
    %141 = vmatpush1.msra.mxu0 0.0
    %142 = vmatprep.subr.mxu0 0.0
    %143 = vmatpush1.msra.mxu0 0.0
    %144 = vmatprep.subr.mxu0 0.0
    %145 = vmatpush1.msra.mxu0 0.0
    %146 = vmatprep.subr.mxu0 0.0
    %147 = vmatpush1.msra.mxu0 0.0
    %148 = vmatprep.subr.mxu0 0.0
    %149 = vmatpush1.msra.mxu0 0.0
    %150 = vmatprep.subr.mxu0 0.0
    %151 = vmatpush1.msra.mxu0 0.0
    %152 = vmatprep.subr.mxu0 0.0
    %153 = vmatpush1.msra.mxu0 0.0
    %154 = vmatprep.subr.mxu0 0.0
    %155 = vmatpush1.msra.mxu0 0.0
    %156 = vmatprep.subr.mxu0 0.0
    %157 = vmatpush1.msra.mxu0 0.0
    %158 = vmatprep.subr.mxu0 0.0
    %159 = vmatpush1.msra.mxu0 0.0
    %160 = vmatprep.subr.mxu0 0.0
    %161 = vmatpush1.msra.mxu0 0.0
    %162 = vmatprep.subr.mxu0 0.0
    %163 = vmatpush1.msra.mxu0 0.0
    %164 = vmatprep.subr.mxu0 0.0
    %165 = vmatpush1.msra.mxu0 0.0
    %166 = vmatprep.subr.mxu0 0.0
    %167 = vmatpush1.msra.mxu0 0.0
    %168 = vmatprep.subr.mxu0 0.0
    %169 = vmatpush1.msra.mxu0 0.0
    %170 = vmatprep.subr.mxu0 0.0
    %171 = vmatpush1.msra.mxu0 0.0
    %172 = vmatprep.subr.mxu0 0.0
    %173 = vmatpush1.msra.mxu0 0.0
    %174 = vmatprep.subr.mxu0 0.0
    %175 = vmatpush1.msra.mxu0 0.0
    %176 = vmatprep.subr.mxu0 0.0
    %177 = vmatpush1.msra.mxu0 0.0
    %178 = vmatprep.subr.mxu0 0.0
    %179 = vmatpush1.msra.mxu0 0.0
    %180 = vmatprep.subr.mxu0 0.0
    %181 = vmatpush1.msra.mxu0 0.0
    %182 = vmatprep.subr.mxu0 0.0
    %183 = vmatpush1.msra.mxu0 0.0
    %184 = vmatprep.subr.mxu0 0.0
    %185 = vmatpush1.msra.mxu0 0.0
    %186 = vmatprep.subr.mxu0 0.0
    %187 = vmatpush1.msra.mxu0 0.0
    %188 = vmatprep.subr.mxu0 0.0
    %189 = vmatpush1.msra.mxu0 0.0
    %190 = vmatprep.subr.mxu0 0.0
    %191 = vmatpush1.msra.mxu0 0.0
    %192 = vmatprep.subr.mxu0 0.0
    %193 = vmatpush1.msra.mxu0 0.0
    %194 = vmatprep.subr.mxu0 0.0
    %195 = vmatpush1.msra.mxu0 0.0
    %196 = vmatprep.mubr.f32.mxu0 0.0
    %197 = vmatmul.mubr.f32.gmra.mrb[0].mxu0 %v59
    %v198 = vpop.f32.mrb[0].mxu0
    %v199 = vadd.f32 %v48, %v198
    %v200 = vpop.f32.mrb[0].mxu0
    %v201 = vadd.f32 %v52, %v200
    %202 = vdwg.mxu0
    %v203 = vld [vmem:[%s3] sm:$0xff]
    %vm204 = vcmp.eq.s32.totalorder %v203, 1
    %v205 = vsel %vm204, 1, 0
    %206 = vset.pattern.permute.xlu0 0
    %207 = vperm.xlu0 %206, %v205
    %v208 = vpop.permute.xlu0 %207
    %vm209 = vcmp.eq.s32.totalorder %v208, 1
    %v210 = vsel %vm209, %v130, %v128
    %vm211 = vcmp.eq.s32.totalorder %v203, 2
    %v212 = vsel %vm211, 1, 0
    %213 = vset.pattern.permute.xlu0 0
    %214 = vperm.xlu0 %213, %v212
    %v215 = vpop.permute.xlu0 %214
    %vm216 = vcmp.eq.s32.totalorder %v215, 1
    %v217 = vsel %vm216, %v199, %v210
    %vm218 = vcmp.eq.s32.totalorder %v203, 3
    %v219 = vsel %vm218, 1, 0
    %220 = vset.pattern.permute.xlu0 0
    %221 = vperm.xlu0 %220, %v219
    %v222 = vpop.permute.xlu0 %221
    %vm223 = vcmp.eq.s32.totalorder %v222, 1
    %v224 = vsel %vm223, %v201, %v217
    %v225 = vlaneseq
    %v226 = vand.u32 %v225, 127
    %vm227 = vcmp.lt.s32.totalorder %v226, 16
    %v228 = vsel %vm227, %v224, -1e+30
    %229 = vmax.xlane.f32.xlu0 %v228
    %v230 = vpop.xlane.xlu0 %229
    %v231 = vsub.f32 %v228, %v230
    %v232 = vmul.f32 %v231, 1.442695
    %v233 = vpow.pop %v232
    %234 = vadd.xlane.f32.xlu0 %v233
    %v235 = vpop.xlane.xlu0 %234
    %v236 = vrcp.pop %v235
    %v237 = vmul.f32 %v235, %v236
    %v238 = vsub.f32 2.0, %v237
    %v239 = vmul.f32 %v236, %v238
    %v240 = vmul.f32 %v233, %v239
    %241 = vst [vmem:[#allocation2] sm:$0xff] %v240
    // Predicated region
    $region18: #{option_critic_head.1} parent=1 // pred_check
      _
    $region19: #{option_critic_head.1} parent=1 // pred_check_branch
      %243 = sbr.rel (0) target = $region21
    $region20: #{option_critic_head.1} parent=1 // pred_region
      %s245 = ssub.s32 128, 128
      %246 = vsyncadd [#allocation3], %s245
      %s248 = sshll.u32 [#allocation2], 4
      %s249 = int_to_ptr.vmem [resolvable:$true] %s248
      %251 = dma.vmem_to_hbm [thread:$0]  %s249, 128, %s4, [#allocation3]
    $region21: #{option_critic_head.1} parent=1 // pred_fallthru
      _
    // Predicated region
    $region22: #{option_critic_head.1} parent=1 // pred_check
      _
    $region23: #{option_critic_head.1} parent=1 // pred_check_branch
      %253 = sbr.rel (0) target = $region25
    $region24: #{option_critic_head.1} parent=1 // pred_region
      %254 = dma.done [#allocation3], 128
    $region25: #{option_critic_head.1} parent=1 // pred_fallthru
      _
    %255 = vsyncpa [#allocation3], 1

</llo_original>
